<compile_context>
chip_gen: v7x
topology: tpu7x:2x2x1
jax: 0.10.0
libtpu: 0.0.40
codegen_flags: <defaults>
</compile_context>

<pallas_src>
import math
from functools import partial

import jax
import jax.numpy as jnp
from jax.experimental import pallas as pl
from jax.experimental.pallas import tpu as pltpu


def _weight_loss_kernel(w_ref, out_ref, acc_ref, mask_ref, *, L,
                        ragged_last, valid_rows_last):
    # w_ref:    (TM, C) input tile, native dtype; C % 128 == 0 and L | C.
    # out_ref:  (1, 1) f32 output.
    # acc_ref:  (1, C) f32 per-lane sum-of-squares accumulator (persists).
    # mask_ref: (1, C) f32 0/1 diff-validity mask (built once at step 0).
    C = w_ref.shape[-1]
    step = pl.program_id(0)
    nsteps = pl.num_programs(0)

    @pl.when(step == 0)
    def _init():
        acc_ref[...] = jnp.zeros_like(acc_ref)
        # Hoisted mask: built once per launch (not per step).  Derived from a
        # rolled iota so it is correct independent of pltpu.roll's rotation
        # direction, and the wrap column is masked too.
        lane = jax.lax.broadcasted_iota(jnp.int32, (8, C), 1)
        lane_nb = pltpu.roll(lane, shift=C - 1, axis=1)      # == roll by -1
        pair_lo = jnp.minimum(lane, lane_nb)
        keep = (jnp.abs(lane_nb - lane) == 1) & ((pair_lo % L) != (L - 1))
        mask_ref[...] = jnp.where(keep, 1.0, 0.0)[0:1, :]

    w = w_ref[...].astype(jnp.float32)               # widen in-register
    w_nb = pltpu.roll(w, shift=C - 1, axis=1)        # neighbour via XLU rotate
    d = (w_nb - w) * mask_ref[...]                   # (TM,C) * (1,C) broadcast
    sq = d * d

    if ragged_last:
        # rows % TM != 0: the last grid step reads a partially out-of-bounds
        # block; zero those garbage rows (static threshold) before summing.
        @pl.when(step < nsteps - 1)
        def _acc_full():
            acc_ref[...] += jnp.sum(sq, axis=0, keepdims=True)

        @pl.when(step == nsteps - 1)
        def _acc_tail():
            row = jax.lax.broadcasted_iota(jnp.int32, sq.shape, 0)
            sq_m = jnp.where(row < valid_rows_last, sq, 0.0)
            acc_ref[...] += jnp.sum(sq_m, axis=0, keepdims=True)
    else:
        acc_ref[...] += jnp.sum(sq, axis=0, keepdims=True)

    @pl.when(step == nsteps - 1)
    def _finalize():
        out_ref[...] = jnp.sqrt(jnp.sum(acc_ref[...], axis=1, keepdims=True))


def weight_loss(weights, *, block_bytes=2 * 1024 * 1024,
                vmem_limit_bytes=32 * 1024 * 1024):
    """Pallas-TPU implementation of WeightLoss.forward(weights)."""
    weights = jnp.asarray(weights)
    L = int(weights.shape[-1])
    n = int(weights.size)
    itemsize = jnp.dtype(weights.dtype).itemsize

    # Lane packing: C = lcm(L, 128) -> every vreg lane carries data and no
    # original row straddles a packed-row boundary (L | C).
    C = (L * 128) // math.gcd(L, 128)

    flat = weights.reshape(-1)                 # row-major, free (no copy)
    if n % C != 0:
        # Rare/small path: pad to one whole packed row (< C zeros).  Safe: the
        # real/pad boundary lands on a masked (lane % L == L-1) position and
        # diffs among zeros are zero.  Large tensors with n % C == 0 take the
        # zero-copy path.
        flat = jnp.pad(flat, (0, C - n % C))
    rows = flat.size // C
    w2d = flat.reshape(rows, C)                # free (no copy)

    # Row tile: ~block_bytes of HBM per block, rounded to the dtype's sublane
    # packing.  The row axis is NOT padded to a TM multiple: a ragged final
    # block is masked in-kernel instead (avoids a whole-array pad copy).
    sub = max(8, 32 // itemsize)               # 8 f32 / 16 bf16 / 32 int8
    tm_target = max(sub, (block_bytes // (C * itemsize)) // sub * sub)
    if rows <= tm_target:
        TM, num_blocks = rows, 1               # block == full dim is legal
    else:
        TM = tm_target
        num_blocks = -(-rows // TM)
    valid_rows_last = rows - (num_blocks - 1) * TM
    ragged_last = valid_rows_last != TM

    # TODO(synk): on v7x (2 TensorCores), a second "parallel" grid axis with
    # per-core partial sums would roughly double streaming throughput.

    out = pl.pallas_call(
        partial(_weight_loss_kernel, L=L, ragged_last=ragged_last,
                valid_rows_last=valid_rows_last),
        out_shape=jax.ShapeDtypeStruct((1, 1), jnp.float32),
        grid_spec=pltpu.PrefetchScalarGridSpec(
            num_scalar_prefetch=0,
            grid=(num_blocks,),
            in_specs=[pl.BlockSpec((TM, C), lambda i: (i, 0))],
            out_specs=pl.BlockSpec((1, 1), lambda i: (0, 0)),
            scratch_shapes=[pltpu.VMEM((1, C), jnp.float32),   # accumulator
                            pltpu.VMEM((1, C), jnp.float32)],  # lane mask
        ),
        compiler_params=pltpu.CompilerParams(
            dimension_semantics=("arbitrary",),
            vmem_limit_bytes=vmem_limit_bytes,
        ),
        cost_estimate=pl.CostEstimate(
            flops=4 * n, transcendentals=1,
            bytes_accessed=n * itemsize + 4),
    )(w2d)
    return out[0, 0]


if __name__ == "__main__":
    def ref(x):
        xf = x.astype(jnp.float32)
        return jnp.sqrt(jnp.sum((xf[..., 1:] - xf[..., :-1]) ** 2))

    k1, k2 = jax.random.split(jax.random.PRNGKey(0))

    # Shape consistent with a "weights" tensor for the module.
    x = jax.random.normal(k1, (2, 4, 16, 16), dtype=jnp.float32)
    d = jax.block_until_ready(weight_loss(x))
    assert jnp.allclose(d, ref(x), rtol=1e-5, atol=1e-5), (d, ref(x))

    # Odd sizes exercise lane packing, tail padding and boundary masking.
    x2 = jax.random.normal(k2, (3, 7, 10), dtype=jnp.float32)
    d2 = jax.block_until_ready(weight_loss(x2))
    assert jnp.allclose(d2, ref(x2), rtol=1e-5, atol=1e-5), (d2, ref(x2))

    print("KERNEL_OK")
</pallas_src>

<mosaic_0001>
module attributes {stable_mosaic.version = 11 : i64} {
  func.func @_weight_loss_kernel(%arg0: i32, %arg1: memref<16x128xf32, #tpu.memory_space<vmem>>, %arg2: memref<1x1xf32, #tpu.memory_space<vmem>>, %arg3: memref<1x128xf32, #tpu.memory_space<vmem>>, %arg4: memref<1x128xf32, #tpu.memory_space<vmem>>) attributes {dimension_semantics = [#tpu.dimension_semantics<arbitrary>], iteration_bounds = array<i64: 1>, scalar_prefetch = 0 : i64, scratch_operands = 2 : i64, tpu.core_type = #tpu.core_type<tc>, window_params = [{transform_indices = @transform_0, window_bounds = array<i64: 16, 128>}, {pipeline_mode = #tpu.pipeline_mode<synchronous>, transform_indices = @transform_1, window_bounds = array<i64: 1, 1>}]} {
    %c0_i32 = arith.constant 0 : i32
    %0 = arith.cmpi eq, %arg0, %c0_i32 : i32
    %1 = arith.extui %0 : i1 to i32
    %c0_i32_0 = arith.constant 0 : i32
    %2 = arith.cmpi ne, %1, %c0_i32_0 : i32
    scf.if %2 {
      %cst_10 = arith.constant 0.000000e+00 : f32
      %18 = vector.broadcast %cst_10 : f32 to vector<1x128xf32>
      %c0_11 = arith.constant 0 : index
      %c0_12 = arith.constant 0 : index
      %19 = vector.load %arg3[%c0_11, %c0_12] : memref<1x128xf32, #tpu.memory_space<vmem>>, vector<1x128xf32>
      tpu.vector_store %arg3[%c0_11, %c0_12], %18 {strides = array<i32>} : memref<1x128xf32, #tpu.memory_space<vmem>>, vector<1x128xf32>,
      %20 = tpu.iota {dimensions = array<i32: 1>} : vector<8x128xi32>
      %c127_i32_13 = arith.constant 127 : i32
      %21 = tpu.dynamic_rotate %20 by %c127_i32_13 dim 1 : vector<8x128xi32>, i32 -> vector<8x128xi32>
      %22 = arith.minsi %20, %21 : vector<8x128xi32>
      %23 = arith.subi %21, %20 : vector<8x128xi32>
      %24 = math.absi %23 : vector<8x128xi32>
      %c1_i32 = arith.constant 1 : i32
      %25 = vector.broadcast %c1_i32 : i32 to vector<8x128xi32>
      %26 = arith.cmpi eq, %24, %25 : vector<8x128xi32>
      %c16_i32 = arith.constant 16 : i32
      %c0_i32_14 = arith.constant 0 : i32
      %27 = arith.cmpi eq, %c16_i32, %c0_i32_14 : i32
      %c1_i32_15 = arith.constant 1 : i32
      %28 = arith.select %27, %c1_i32_15, %c16_i32 : i32
      %29 = vector.broadcast %28 : i32 to vector<8x128xi32>
      %30 = arith.remsi %22, %29 : vector<8x128xi32>
      %c0_i32_16 = arith.constant 0 : i32
      %31 = vector.broadcast %c0_i32_16 : i32 to vector<8x128xi32>
      %32 = arith.cmpi ne, %30, %31 : vector<8x128xi32>
      %c0_i32_17 = arith.constant 0 : i32
      %33 = vector.broadcast %c0_i32_17 : i32 to vector<8x128xi32>
      %34 = arith.cmpi slt, %30, %33 : vector<8x128xi32>
      %c0_i32_18 = arith.constant 0 : i32
      %35 = arith.cmpi slt, %28, %c0_i32_18 : i32
      %36 = vector.broadcast %35 : i1 to vector<8x128xi1>
      %37 = vector.broadcast %36 : vector<8x128xi1> to vector<8x128xi1>
      %38 = arith.xori %34, %37 : vector<8x128xi1>
      %39 = arith.andi %38, %32 : vector<8x128xi1>
      %40 = vector.broadcast %28 : i32 to vector<8x128xi32>
      %41 = arith.addi %30, %40 : vector<8x128xi32>
      %42 = arith.select %39, %41, %30 : vector<8x128xi1>, vector<8x128xi32>
      %c15_i32 = arith.constant 15 : i32
      %43 = vector.broadcast %c15_i32 : i32 to vector<8x128xi32>
      %44 = arith.cmpi ne, %42, %43 : vector<8x128xi32>
      %45 = arith.andi %26, %44 : vector<8x128xi1>
      %cst_19 = arith.constant 1.000000e+00 : f32
      %cst_20 = arith.constant 0.000000e+00 : f32
      %46 = vector.broadcast %cst_19 : f32 to vector<8x128xf32>
      %47 = vector.broadcast %cst_20 : f32 to vector<8x128xf32>
      %48 = arith.select %45, %46, %47 : vector<8x128xi1>, vector<8x128xf32>
      %49 = vector.extract_strided_slice %48 {offsets = [0, 0], sizes = [1, 128], strides = [1, 1]} : vector<8x128xf32> to vector<1x128xf32>
      %c0_21 = arith.constant 0 : index
      %c0_22 = arith.constant 0 : index
      %50 = vector.load %arg4[%c0_21, %c0_22] : memref<1x128xf32, #tpu.memory_space<vmem>>, vector<1x128xf32>
      tpu.vector_store %arg4[%c0_21, %c0_22], %49 {strides = array<i32>} : memref<1x128xf32, #tpu.memory_space<vmem>>, vector<1x128xf32>,
    } else {
    }
    %c0 = arith.constant 0 : index
    %c0_1 = arith.constant 0 : index
    %3 = vector.load %arg1[%c0, %c0_1] : memref<16x128xf32, #tpu.memory_space<vmem>>, vector<16x128xf32>
    %c127_i32 = arith.constant 127 : i32
    %4 = tpu.dynamic_rotate %3 by %c127_i32 dim 1 : vector<16x128xf32>, i32 -> vector<16x128xf32>
    %5 = arith.subf %4, %3 : vector<16x128xf32>
    %c0_2 = arith.constant 0 : index
    %c0_3 = arith.constant 0 : index
    %6 = vector.load %arg4[%c0_2, %c0_3] : memref<1x128xf32, #tpu.memory_space<vmem>>, vector<1x128xf32>
    %7 = vector.broadcast %6 : vector<1x128xf32> to vector<16x128xf32>
    %8 = arith.mulf %5, %7 : vector<16x128xf32>
    %9 = arith.mulf %8, %8 : vector<16x128xf32>
    %c0_4 = arith.constant 0 : index
    %c0_5 = arith.constant 0 : index
    %10 = vector.load %arg3[%c0_4, %c0_5] : memref<1x128xf32, #tpu.memory_space<vmem>>, vector<1x128xf32>
    %cst = arith.constant dense<0.000000e+00> : vector<128xf32>
    %11 = vector.multi_reduction <add>, %9, %cst [0] : vector<16x128xf32> to vector<128xf32>
    %12 = vector.shape_cast %11 : vector<128xf32> to vector<1x128xf32>
    %13 = arith.addf %10, %12 : vector<1x128xf32>
    %c0_6 = arith.constant 0 : index
    %c0_7 = arith.constant 0 : index
    %14 = vector.load %arg3[%c0_6, %c0_7] : memref<1x128xf32, #tpu.memory_space<vmem>>, vector<1x128xf32>
    tpu.vector_store %arg3[%c0_6, %c0_7], %13 {strides = array<i32>} : memref<1x128xf32, #tpu.memory_space<vmem>>, vector<1x128xf32>,
    %c0_i32_8 = arith.constant 0 : i32
    %15 = arith.cmpi eq, %arg0, %c0_i32_8 : i32
    %16 = arith.extui %15 : i1 to i32
    %c0_i32_9 = arith.constant 0 : i32
    %17 = arith.cmpi ne, %16, %c0_i32_9 : i32
    scf.if %17 {
      %c0_10 = arith.constant 0 : index
      %c0_11 = arith.constant 0 : index
      %18 = vector.load %arg3[%c0_10, %c0_11] : memref<1x128xf32, #tpu.memory_space<vmem>>, vector<1x128xf32>
      %cst_12 = arith.constant dense<0.000000e+00> : vector<1xf32>
      %19 = vector.multi_reduction <add>, %18, %cst_12 [1] : vector<1x128xf32> to vector<1xf32>
      %20 = vector.shape_cast %19 : vector<1xf32> to vector<1x1xf32>
      %21 = math.sqrt %20 : vector<1x1xf32>
      %c0_13 = arith.constant 0 : index
      %c0_14 = arith.constant 0 : index
      %22 = vector.load %arg2[%c0_13, %c0_14] : memref<1x1xf32, #tpu.memory_space<vmem>>, vector<1x1xf32>
      tpu.vector_store %arg2[%c0_13, %c0_14], %21 {strides = array<i32>} : memref<1x1xf32, #tpu.memory_space<vmem>>, vector<1x1xf32>,
    } else {
    }
    return
  }
  func.func @transform_0(%arg0: i32) -> (i32, i32) {
    %c0_i32 = arith.constant 0 : i32
    %c0_i32_0 = arith.constant 0 : i32
    return %arg0, %c0_i32 : i32, i32
  }
  func.func @transform_1(%arg0: i32) -> (i32, i32) {
    %c0_i32 = arith.constant 0 : i32
    %c0_i32_0 = arith.constant 0 : i32
    %c0_i32_1 = arith.constant 0 : i32
    return %c0_i32, %c0_i32_0 : i32, i32
  }
}

</mosaic_0001>

<llo_original>
// kernel: tpu_custom_call.1
$region0: #{tpu_custom_call.1}
  #allocation0 [shape = 'u32[]', space=smem, size = 0x4, offset = 0x4, fixed_abs, tag = 'smem constant byte address 0x4 - core index']
  #allocation1 [shape = 'u32[144,128]{1,0:T(1,128)}', space=vmem, size = 0x12000, scoped, tag = 'internal scratch']
  #allocation2 [shape = 'f32[1,128]{1,0:T(1,128)}', space=vmem, size = 0x200, scoped, tag = 'scratch operand']
  #allocation3 [shape = 'f32[1,128]{1,0:T(1,128)}', space=vmem, size = 0x200, scoped, tag = 'scratch operand']
  %s0 = inlined_call_operand.hbm [shape: f32[16,128], index: 0, kind: input, shape index: {}]
  %s1 = inlined_call_operand.hbm [shape: f32[1,1], index: 1, kind: output, shape index: {}]
  %s2 = sld [smem:[#allocation0]]
  $region26: #{tpu_custom_call.1} parent=0
    _
  %s4 = ssub.s32 1, %s2
  %s5 = scalar_select 0, %s4, %s2
  $region1: #{tpu_custom_call.1} parent=0
    #allocation4 [shape = 'u8[8192]{0}', space=vmem, size = 0x2000, scoped, tag = 'input window, operand 0, single buffered']
    #allocation5 [shape = 's32[1]{0}', space=sflag, size = 0x4, scoped, tag = 'scoped memory for tpu_custom_call.1']
    #allocation6 [shape = 's32[1]{0}', space=sflag, size = 0x4, scoped, tag = 'scoped memory for tpu_custom_call.1']
    #allocation7 [shape = 'u8[512]{0}', space=vmem, size = 0x400, scoped, tag = 'output window, operand 0, single buffered']
    %6 = vsyncpa [#allocation5], 0
    %7 = vsyncpa [#allocation6], 0
    // Predicated region
    $region2: #{tpu_custom_call.1} parent=1 // pred_check
      _
    $region3: #{tpu_custom_call.1} parent=1 // pred_check_branch
      %9 = sbr.rel (0) target = $region5
    $region4: #{tpu_custom_call.1} parent=1 // pred_region
      %s11 = ssub.s32 256, 256
      %12 = vsyncadd [#allocation5], %s11
      %s13 = sshll.u32 [#allocation4], 4
      %s14 = int_to_ptr.vmem [resolvable:$true] %s13
      %19 = dma.hbm_to_vmem [thread:$0]  %s0, 256, %s14, [#allocation5], 128, 128, 8
    $region5: #{tpu_custom_call.1} parent=1 // pred_fallthru
      _
    // Predicated region
    $region6: #{tpu_custom_call.1} parent=1 // pred_check
      _
    $region7: #{tpu_custom_call.1} parent=1 // pred_check_branch
      %21 = sbr.rel (0) target = $region9
    $region8: #{tpu_custom_call.1} parent=1 // pred_region
      %22 = dma.done [#allocation5], 256
    $region9: #{tpu_custom_call.1} parent=1 // pred_fallthru
      _
    %p23 = scmp.eq.s32.totalorder 0, 0
    // Predicated region
    $region10: #{tpu_custom_call.1} parent=1 // pred_check
      %p24 = pneg %p23
    $region11: #{tpu_custom_call.1} parent=1 // pred_check_branch
      %26 = sbr.rel (%p24) target = $region13
    $region12: #{tpu_custom_call.1} parent=1 // pred_region
      %27 = vst [vmem:[#allocation2] sm:$0x1] 0.0
      %v28 = vlaneseq
      %v29 = vand.u32 %v28, 127
      %30 = vrot.lane.b32.xlu0 %v29, 127
      %v31 = vpop.permute.xlu0 %30
      %vm32 = vcmp.lt.s32.totalorder %v29, %v31
      %v33 = vsel %vm32, %v29, %v31
      %v34 = vsub.s32 %v31, %v29
      %vm35 = vcmp.lt.s32.totalorder %v34, 0
      %v36 = vsub.s32 0, %v34
      %v37 = vsel %vm35, %v36, %v34
      %vm38 = vcmp.eq.s32.totalorder %v37, 1
      %vm39 = vcmp.lt.s32.totalorder %v33, 0
      %v40 = vsub.s32 0, %v33
      %v41 = vsel %vm39, %v40, %v33
      %v42 = vshrl.u32 %v41, 4
      %v43 = vand.u32 %v41, 15
      %v44 = vsub.s32 0, %v43
      %v45 = vsel %vm39, %v44, %v43
      %vm46 = vcmp.ne.s32.totalorder %v45, 0
      %vm47 = vcmp.lt.s32.totalorder %v45, 0
      %vm48 = vmand %vm47, %vm46
      %v49 = vadd.s32 %v45, 16
      %v50 = vsel %vm48, %v49, %v45
      %vm51 = vcmp.ne.s32.totalorder %v50, 15
      %vm52 = vmand %vm38, %vm51
      %v53 = vsel %vm52, 1.0, 0.0
      %54 = vst [vmem:[#allocation3] sm:$0x1] %v53
    $region13: #{tpu_custom_call.1} parent=1 // pred_fallthru
      _
    %v55 = vld [vmem:[#allocation4] sm:$0xff]
    %v56 = vld [vmem:[#allocation4 + $0x8] sm:$0xff]
    %57 = vrot.lane.b32.xlu0 %v55, 127
    %v58 = vpop.permute.xlu0 %57
    %59 = vrot.lane.b32.xlu0 %v56, 127
    %v60 = vpop.permute.xlu0 %59
    %v61 = vsub.f32 %v58, %v55
    %v62 = vsub.f32 %v60, %v56
    %v63 = vld [vmem:[#allocation3] sm:$0x1]
    %v65 = vlaneseq
    %v66 = vshrl.u32 %v65, 7
    %v67 = vsub.s32 0, %v66
    %v68 = vrot.slane %v63, %v67
    %v70 = vmul.f32 %v61, %v68
    %v71 = vmul.f32 %v62, %v68
    %v72 = vmul.f32 %v70, %v70
    %v73 = vmul.f32 %v71, %v71
    %v74 = vld [vmem:[#allocation2] sm:$0x1]
    %v75 = vadd.f32 %v72, %v73
    %v76 = vrot.slane %v75, 4
    %v77 = vadd.f32 %v75, %v76
    %v78 = vrot.slane %v77, 2
    %v79 = vadd.f32 %v77, %v78
    %v80 = vrot.slane %v79, 1
    %v81 = vadd.f32 %v79, %v80
    %v82 = vadd.f32 %v74, %v81
    %83 = vst [vmem:[#allocation2] sm:$0x1] %v82
    // Predicated region
    $region14: #{tpu_custom_call.1} parent=1 // pred_check
      %p84 = pneg %p23
    $region15: #{tpu_custom_call.1} parent=1 // pred_check_branch
      %86 = sbr.rel (%p84) target = $region17
    $region16: #{tpu_custom_call.1} parent=1 // pred_region
      %v87 = vld [vmem:[#allocation2] sm:$0x1]
      %vm88 = vcmask 1040384
      %v89 = vsel %vm88, %v87, 0.0
      %90 = vadd.xlane.f32.xlu0 %v89
      %v91 = vpop.xlane.xlu0 %90
      %v92 = vrsqrt.pop %v91
      %v93 = vmul.f32 %v91, %v92
      %vm94 = vcmp.eq.f32.partialorder %v91, inf
      %v95 = vsel %vm94, %v91, %v93
      %vm96 = vcmp.eq.f32.partialorder %v91, 0.0
      %v97 = vand.u32 %v91, 2147483648
      %v98 = vsel %vm96, %v97, %v95
      %vm99 = vcmask 0
      %100 = vst.msk [vmem:[#allocation7] sm:$0x1] %vm99, %v98
    $region17: #{tpu_custom_call.1} parent=1 // pred_fallthru
      _
    // Predicated region
    $region18: #{tpu_custom_call.1} parent=1 // pred_check
      _
    $region19: #{tpu_custom_call.1} parent=1 // pred_check_branch
      %102 = sbr.rel (0) target = $region21
    $region20: #{tpu_custom_call.1} parent=1 // pred_region
      %s104 = ssub.s32 16, 16
      %105 = vsyncadd [#allocation6], %s104
      %s107 = sshll.u32 [#allocation7], 4
      %s108 = int_to_ptr.vmem [resolvable:$true] %s107
      %110 = dma.vmem_to_hbm [thread:$0]  %s108, 16, %s1, [#allocation6]
    $region21: #{tpu_custom_call.1} parent=1 // pred_fallthru
      _
    // Predicated region
    $region22: #{tpu_custom_call.1} parent=1 // pred_check
      _
    $region23: #{tpu_custom_call.1} parent=1 // pred_check_branch
      %112 = sbr.rel (0) target = $region25
    $region24: #{tpu_custom_call.1} parent=1 // pred_region
      %113 = dma.done [#allocation6], 16
    $region25: #{tpu_custom_call.1} parent=1 // pred_fallthru
      _
    %114 = vsyncpa [#allocation5], 1
    %115 = vsyncpa [#allocation6], 1

</llo_original>
